<compile_context>
chip_gen: v7x
topology: tpu7x:2x2x1
jax: 0.10.0
libtpu: 0.0.40
codegen_flags: <defaults>
</compile_context>

<pallas_src>
import jax
import jax.numpy as jnp
import numpy as np
from jax.experimental import pallas as pl
from jax.experimental.pallas import tpu as pltpu


def attention_kernel(hidden_ref, enc_ref, wh_ref, we_ref, bias_ref, v_ref, out_ref):
    # hidden_ref: (1, Bt, Hd)        enc_ref: (S, 1, Bt, E2)
    # wh_ref:     (Hd, Hd)           we_ref:  (E2, Hd)
    # bias_ref:   (1, Hd)            v_ref:   (1, Hd)
    # out_ref:    (1, Bt, S)
    S = enc_ref.shape[0]
    Bt = hidden_ref.shape[1]
    Hd = hidden_ref.shape[2]
    E2 = enc_ref.shape[3]

    h = hidden_ref[0]                                     # (Bt, Hd)
    # Layout-preserving collapse (Bt is always a sublane multiple).
    enc = enc_ref[...].reshape(S * Bt, E2)                # (S*Bt, E2)

    # Projections on the MXU; f32 accumulation regardless of input dtype.
    hproj = jnp.dot(h, wh_ref[...],
                    preferred_element_type=jnp.float32)   # (Bt, Hd)
    eproj = jnp.dot(enc, we_ref[...],
                    preferred_element_type=jnp.float32)   # (S*Bt, Hd)

    # Fold the bias into the small per-tile hidden projection (Bt*Hd add),
    # not the (S, Bt, Hd) tensor.
    hb = hproj + bias_ref[...]                            # (Bt, Hd)

    # energy = tanh(hidden proj (broadcast over S) + enc proj + bias)
    energy = jnp.tanh(eproj.reshape(S, Bt, Hd) + hb[None, :, :])   # (S, Bt, Hd)

    # scores[s, b] = <energy[s, b, :], v>   (lane reduction on the XLU)
    scores = jnp.sum(energy * v_ref[...][None, :, :], axis=-1)     # (S, Bt)
    scores = scores.T                                               # (Bt, S) lane-dense

    # Softmax over src_len (the lane axis).  Exact division: the denominator is
    # only (Bt, 1) elements, so exactness is free and rows sum to 1.
    m = jnp.max(scores, axis=-1, keepdims=True)
    ex = jnp.exp(scores - m)
    denom = jnp.sum(ex, axis=-1, keepdims=True)
    out_ref[0] = ex / denom


def _choose_block_batch(B, S, E2, enc_itemsize, weight_bytes,
                        vmem_budget_bytes=48 << 20):
    """Pick the batch tile Bt (a divisor of the padded B).

    Largest Bt whose double-buffered enc tile (2 * S*Bt*E2*itemsize) plus the
    (double-buffered) resident weights fits the VMEM budget, preferring
    Bt % 8 == 0 (layout-preserving collapse).  Among fitting aligned tiles,
    prefer the largest one that still leaves >= 2 grid steps (megacore) once
    the MXU M dimension is fed (S*Bt >= 256); otherwise just the largest.
    """
    divisors = [d for d in range(1, B + 1) if B % d == 0]

    def fits(d):
        return 2 * S * d * E2 * enc_itemsize + 2 * weight_bytes <= vmem_budget_bytes

    fitting = [d for d in divisors if fits(d)] or [divisors[0]]
    aligned = [d for d in fitting if d % 8 == 0] or fitting
    fed = [d for d in aligned if d * S >= 256 and B // d >= 2]
    return max(fed) if fed else max(aligned)


def attention_forward(hidden, encoder_outputs, W, b, v, *,
                      block_batch=None, matmul_dtype=None):
    """hidden: (B, Hd); encoder_outputs: (S, B, 2*He) -- PyTorch axis convention.

    matmul_dtype: optionally cast encoder_outputs / hidden / weights (e.g. to
    jnp.bfloat16 on v6e/v7x) AT THE BOUNDARY; f32 accumulation is retained
    in-kernel, but projection numerics change (looser tolerance expected).
    """
    S, B, E2 = encoder_outputs.shape
    Hd = hidden.shape[1]
    assert W.shape == (Hd, Hd + E2)

    # cat order in the PyTorch forward is (hidden, encoder_outputs) along dim=2,
    # so the first Hd columns of W act on hidden, the remaining E2 on enc.
    wh_T = jnp.transpose(W[:, :Hd])          # (Hd, Hd)
    we_T = jnp.transpose(W[:, Hd:])          # (E2, Hd)

    enc = encoder_outputs
    hid = hidden
    if matmul_dtype is not None:
        # bf16 at the boundary: halves the dominant HBM stream and the enc VMEM
        # tile on mem-bound v6e/v7x (leave f32 on v5e: no bf16 VPU/EUP path).
        wh_T = wh_T.astype(matmul_dtype)
        we_T = we_T.astype(matmul_dtype)
        enc = enc.astype(matmul_dtype)
        hid = hid.astype(matmul_dtype)

    # Pad the batch so the chosen Bt fills whole sublane groups: the in-kernel
    # (S, 1, Bt, E2) -> (S*Bt, E2) collapse is layout-preserving only then.
    sublane = 16 if enc.dtype == jnp.bfloat16 else 8
    B_pad = ((B + sublane - 1) // sublane) * sublane
    if B_pad != B:
        hid = jnp.pad(hid, ((0, B_pad - B), (0, 0)))
        enc = jnp.pad(enc, ((0, 0), (0, B_pad - B), (0, 0)))

    enc_itemsize = enc.dtype.itemsize
    weight_bytes = (wh_T.size + we_T.size) * wh_T.dtype.itemsize
    Bt = (_choose_block_batch(B_pad, S, E2, enc_itemsize, weight_bytes)
          if block_batch is None else block_batch)
    assert B_pad % Bt == 0, (B_pad, Bt)
    nb = B_pad // Bt

    b2 = b.reshape(1, Hd).astype(jnp.float32)
    v2 = v.reshape(1, Hd).astype(jnp.float32)

    # Metadata-only reshapes (row-major split of the batch axis): no HBM copies,
    # encoder_outputs keeps its native (S, B, E2) layout — no host transpose.
    hidden_t = hid.reshape(nb, Bt, Hd)
    enc_t = enc.reshape(S, nb, Bt, E2)

    # Raise the scoped VMEM limit only when the double-buffered tiles need it
    # (default scoped limit is 16/32 MiB; physical 128 MiB on v5e/v6e, 64 on v7x).
    est_vmem = (2 * S * Bt * E2 * enc_itemsize          # enc tile, double-buffered
                + 2 * Bt * Hd * hid.dtype.itemsize      # hidden tile
                + 2 * Bt * S * 4                        # output tile
                + 2 * weight_bytes                      # resident weights
                + 4 * Hd * 4)                           # bias + v
    compiler_kwargs = dict(dimension_semantics=("parallel",))
    if est_vmem > (24 << 20):
        compiler_kwargs["vmem_limit_bytes"] = int(min(est_vmem + (8 << 20), 96 << 20))

    out = pl.pallas_call(
        attention_kernel,
        out_shape=jax.ShapeDtypeStruct((nb, Bt, S), jnp.float32),
        grid_spec=pltpu.PrefetchScalarGridSpec(
            num_scalar_prefetch=0,
            grid=(nb,),
            in_specs=[
                pl.BlockSpec((1, Bt, Hd), lambda i: (i, 0, 0)),
                pl.BlockSpec((S, 1, Bt, E2), lambda i: (0, i, 0, 0)),
                pl.BlockSpec((Hd, Hd), lambda i: (0, 0)),
                pl.BlockSpec((E2, Hd), lambda i: (0, 0)),
                pl.BlockSpec((1, Hd), lambda i: (0, 0)),
                pl.BlockSpec((1, Hd), lambda i: (0, 0)),
            ],
            out_specs=pl.BlockSpec((1, Bt, S), lambda i: (i, 0, 0)),
        ),
        compiler_params=pltpu.CompilerParams(**compiler_kwargs),
    )(hidden_t, enc_t, wh_T, we_T, b2, v2)

    # Drop padded batch rows (softmax is per-row, padded rows never leak).
    return out.reshape(B_pad, S)[:B]


def attention_ref(hidden, encoder_outputs, W, b, v):
    """Pure-JAX reference mirroring the PyTorch forward."""
    S, B, _ = encoder_outputs.shape
    h = jnp.repeat(hidden[:, None, :], S, axis=1)           # (B, S, Hd)
    enc = jnp.transpose(encoder_outputs, (1, 0, 2))         # (B, S, E2)
    x = jnp.concatenate([h, enc], axis=2)                   # (B, S, Hd+E2)
    energy = jnp.tanh(jnp.einsum('bsi,oi->bso', x, W) + b)  # (B, S, Hd)
    scores = jnp.einsum('bso,o->bs', energy, v)             # (B, S)
    return jax.nn.softmax(scores, axis=1)


def _run_case(key, batch, src_len, enc_hid_dim, dec_hid_dim,
              matmul_dtype=None, tol=1e-4):
    k_h, k_e, k_w, k_b, k_v = jax.random.split(key, 5)
    E2 = enc_hid_dim * 2
    hidden = jax.random.normal(k_h, (batch, dec_hid_dim), dtype=jnp.float32)
    encoder_outputs = jax.random.normal(k_e, (src_len, batch, E2),
                                        dtype=jnp.float32)
    in_features = E2 + dec_hid_dim
    bound = 1.0 / np.sqrt(in_features)
    W = jax.random.uniform(k_w, (dec_hid_dim, in_features),
                           minval=-bound, maxval=bound, dtype=jnp.float32)
    b = jax.random.uniform(k_b, (dec_hid_dim,),
                           minval=-bound, maxval=bound, dtype=jnp.float32)
    v = jax.random.uniform(k_v, (dec_hid_dim,), dtype=jnp.float32)  # torch.rand -> U[0,1)

    out = jax.block_until_ready(
        attention_forward(hidden, encoder_outputs, W, b, v,
                          matmul_dtype=matmul_dtype))
    ref = attention_ref(hidden, encoder_outputs, W, b, v)

    assert out.shape == (batch, src_len)
    assert np.allclose(np.asarray(out), np.asarray(ref), rtol=tol, atol=tol), (
        np.max(np.abs(np.asarray(out) - np.asarray(ref))))
    # Exact division in the kernel softmax -> rows sum to 1 tightly.
    assert np.allclose(np.asarray(out).sum(axis=1), 1.0, atol=1e-5)


if __name__ == "__main__":
    key = jax.random.PRNGKey(0)
    k1, k2, k3 = jax.random.split(key, 3)
    # Small case matching the module spec (batch padded to 8 internally).
    _run_case(k1, batch=2, src_len=8, enc_hid_dim=16, dec_hid_dim=32)
    # Larger batch exercising the batch-tiled single-matmul path.
    _run_case(k2, batch=16, src_len=8, enc_hid_dim=16, dec_hid_dim=32)
    # bf16-at-the-boundary path (v6e/v7x mem-bound optimisation); f32 accumulate.
    _run_case(k3, batch=16, src_len=8, enc_hid_dim=16, dec_hid_dim=32,
              matmul_dtype=jnp.bfloat16, tol=2e-2)
    print("KERNEL_OK")
</pallas_src>

<mosaic_0001>
module attributes {stable_mosaic.version = 11 : i64} {
  func.func @attention_kernel(%arg0: i32, %arg1: memref<1x8x32xf32, #tpu.memory_space<vmem>>, %arg2: memref<8x1x8x32xf32, #tpu.memory_space<vmem>>, %arg3: memref<32x32xf32, #tpu.memory_space<vmem>>, %arg4: memref<32x32xf32, #tpu.memory_space<vmem>>, %arg5: memref<1x32xf32, #tpu.memory_space<vmem>>, %arg6: memref<1x32xf32, #tpu.memory_space<vmem>>, %arg7: memref<1x8x8xf32, #tpu.memory_space<vmem>>) attributes {dimension_semantics = [#tpu.dimension_semantics<parallel>], iteration_bounds = array<i64: 1>, scalar_prefetch = 0 : i64, scratch_operands = 0 : i64, tpu.core_type = #tpu.core_type<tc>, window_params = [{transform_indices = @transform_0, window_bounds = array<i64: 1, 8, 32>}, {transform_indices = @transform_1, window_bounds = array<i64: 8, 1, 8, 32>}, {pipeline_mode = #tpu.pipeline_mode<synchronous>, transform_indices = @transform_2, window_bounds = array<i64: 32, 32>}, {pipeline_mode = #tpu.pipeline_mode<synchronous>, transform_indices = @transform_3, window_bounds = array<i64: 32, 32>}, {pipeline_mode = #tpu.pipeline_mode<synchronous>, transform_indices = @transform_4, window_bounds = array<i64: 1, 32>}, {pipeline_mode = #tpu.pipeline_mode<synchronous>, transform_indices = @transform_5, window_bounds = array<i64: 1, 32>}, {transform_indices = @transform_6, window_bounds = array<i64: 1, 8, 8>}]} {
    %c0 = arith.constant 0 : index
    %c0_0 = arith.constant 0 : index
    %c0_1 = arith.constant 0 : index
    %0 = vector.load %arg1[%c0, %c0_0, %c0_1] : memref<1x8x32xf32, #tpu.memory_space<vmem>>, vector<1x8x32xf32>
    %1 = vector.shape_cast %0 : vector<1x8x32xf32> to vector<8x32xf32>
    %c0_2 = arith.constant 0 : index
    %c0_3 = arith.constant 0 : index
    %c0_4 = arith.constant 0 : index
    %c0_5 = arith.constant 0 : index
    %2 = vector.load %arg2[%c0_2, %c0_3, %c0_4, %c0_5] : memref<8x1x8x32xf32, #tpu.memory_space<vmem>>, vector<8x1x8x32xf32>
    %3 = vector.shape_cast %2 : vector<8x1x8x32xf32> to vector<64x32xf32>
    %c0_6 = arith.constant 0 : index
    %c0_7 = arith.constant 0 : index
    %4 = vector.load %arg3[%c0_6, %c0_7] : memref<32x32xf32, #tpu.memory_space<vmem>>, vector<32x32xf32>
    %cst = arith.constant dense<0.000000e+00> : vector<8x32xf32>
    %5 = tpu.matmul %1, %4, %cst {dimension_numbers = #tpu.dot_dimension_numbers<[1], [0], [0], [1], [0, 0, 1, 1], [], []>} : vector<8x32xf32>, vector<32x32xf32>, vector<8x32xf32> -> vector<8x32xf32>
    %c0_8 = arith.constant 0 : index
    %c0_9 = arith.constant 0 : index
    %6 = vector.load %arg4[%c0_8, %c0_9] : memref<32x32xf32, #tpu.memory_space<vmem>>, vector<32x32xf32>
    %cst_10 = arith.constant dense<0.000000e+00> : vector<64x32xf32>
    %7 = tpu.matmul %3, %6, %cst_10 {dimension_numbers = #tpu.dot_dimension_numbers<[1], [0], [0], [1], [0, 0, 1, 1], [], []>} : vector<64x32xf32>, vector<32x32xf32>, vector<64x32xf32> -> vector<64x32xf32>
    %c0_11 = arith.constant 0 : index
    %c0_12 = arith.constant 0 : index
    %8 = vector.load %arg5[%c0_11, %c0_12] : memref<1x32xf32, #tpu.memory_space<vmem>>, vector<1x32xf32>
    %9 = vector.broadcast %8 : vector<1x32xf32> to vector<8x32xf32>
    %10 = arith.addf %5, %9 : vector<8x32xf32>
    %11 = vector.shape_cast %7 : vector<64x32xf32> to vector<8x8x32xf32>
    %12 = vector.shape_cast %10 : vector<8x32xf32> to vector<1x8x32xf32>
    %13 = vector.broadcast %12 : vector<1x8x32xf32> to vector<8x8x32xf32>
    %14 = arith.addf %11, %13 : vector<8x8x32xf32>
    %15 = math.tanh %14 : vector<8x8x32xf32>
    %c0_13 = arith.constant 0 : index
    %c0_14 = arith.constant 0 : index
    %16 = vector.load %arg6[%c0_13, %c0_14] : memref<1x32xf32, #tpu.memory_space<vmem>>, vector<1x32xf32>
    %17 = vector.shape_cast %16 : vector<1x32xf32> to vector<1x1x32xf32>
    %18 = vector.broadcast %17 : vector<1x1x32xf32> to vector<8x8x32xf32>
    %19 = arith.mulf %15, %18 : vector<8x8x32xf32>
    %cst_15 = arith.constant dense<0.000000e+00> : vector<8x8xf32>
    %20 = vector.multi_reduction <add>, %19, %cst_15 [2] : vector<8x8x32xf32> to vector<8x8xf32>
    %21 = tpu.transpose %20, [1, 0] : vector<8x8xf32> -> vector<8x8xf32>
    %cst_16 = arith.constant dense<0xFF800000> : vector<8xf32>
    %22 = vector.multi_reduction <maximumf>, %21, %cst_16 [1] : vector<8x8xf32> to vector<8xf32>
    %23 = vector.shape_cast %22 : vector<8xf32> to vector<8x1xf32>
    %24 = vector.broadcast %23 : vector<8x1xf32> to vector<8x8xf32>
    %25 = arith.subf %21, %24 : vector<8x8xf32>
    %26 = math.exp %25 : vector<8x8xf32>
    %cst_17 = arith.constant dense<0.000000e+00> : vector<8xf32>
    %27 = vector.multi_reduction <add>, %26, %cst_17 [1] : vector<8x8xf32> to vector<8xf32>
    %28 = vector.shape_cast %27 : vector<8xf32> to vector<8x1xf32>
    %29 = vector.broadcast %28 : vector<8x1xf32> to vector<8x8xf32>
    %30 = arith.divf %26, %29 : vector<8x8xf32>
    %c0_18 = arith.constant 0 : index
    %c0_19 = arith.constant 0 : index
    %c0_20 = arith.constant 0 : index
    %31 = vector.load %arg7[%c0_18, %c0_19, %c0_20] : memref<1x8x8xf32, #tpu.memory_space<vmem>>, vector<1x8x8xf32>
    %32 = vector.shape_cast %31 : vector<1x8x8xf32> to vector<8x8xf32>
    %33 = vector.shape_cast %30 : vector<8x8xf32> to vector<1x8x8xf32>
    tpu.vector_store %arg7[%c0_18, %c0_19, %c0_20], %33 {strides = array<i32>} : memref<1x8x8xf32, #tpu.memory_space<vmem>>, vector<1x8x8xf32>,
    return
  }
  func.func @transform_0(%arg0: i32) -> (i32, i32, i32) {
    %c0_i32 = arith.constant 0 : i32
    %c0_i32_0 = arith.constant 0 : i32
    %c0_i32_1 = arith.constant 0 : i32
    return %arg0, %c0_i32, %c0_i32_0 : i32, i32, i32
  }
  func.func @transform_1(%arg0: i32) -> (i32, i32, i32, i32) {
    %c0_i32 = arith.constant 0 : i32
    %c0_i32_0 = arith.constant 0 : i32
    %c0_i32_1 = arith.constant 0 : i32
    %c0_i32_2 = arith.constant 0 : i32
    return %c0_i32, %arg0, %c0_i32_0, %c0_i32_1 : i32, i32, i32, i32
  }
  func.func @transform_2(%arg0: i32) -> (i32, i32) {
    %c0_i32 = arith.constant 0 : i32
    %c0_i32_0 = arith.constant 0 : i32
    %c0_i32_1 = arith.constant 0 : i32
    return %c0_i32, %c0_i32_0 : i32, i32
  }
  func.func @transform_3(%arg0: i32) -> (i32, i32) {
    %c0_i32 = arith.constant 0 : i32
    %c0_i32_0 = arith.constant 0 : i32
    %c0_i32_1 = arith.constant 0 : i32
    return %c0_i32, %c0_i32_0 : i32, i32
  }
  func.func @transform_4(%arg0: i32) -> (i32, i32) {
    %c0_i32 = arith.constant 0 : i32
    %c0_i32_0 = arith.constant 0 : i32
    %c0_i32_1 = arith.constant 0 : i32
    return %c0_i32, %c0_i32_0 : i32, i32
  }
  func.func @transform_5(%arg0: i32) -> (i32, i32) {
    %c0_i32 = arith.constant 0 : i32
    %c0_i32_0 = arith.constant 0 : i32
    %c0_i32_1 = arith.constant 0 : i32
    return %c0_i32, %c0_i32_0 : i32, i32
  }
  func.func @transform_6(%arg0: i32) -> (i32, i32, i32) {
    %c0_i32 = arith.constant 0 : i32
    %c0_i32_0 = arith.constant 0 : i32
    %c0_i32_1 = arith.constant 0 : i32
    return %arg0, %c0_i32, %c0_i32_0 : i32, i32, i32
  }
}

</mosaic_0001>

<llo_original>
// kernel: tpu_custom_call.1
$region0: #{tpu_custom_call.1}
  #allocation0 [shape = 'u32[]', space=smem, size = 0x4, offset = 0x4, fixed_abs, tag = 'smem constant byte address 0x4 - core index']
  #allocation1 [shape = 'u32[144,128]{1,0:T(1,128)}', space=vmem, size = 0x12000, scoped, tag = 'internal scratch']
  %s0 = inlined_call_operand.hbm [shape: f32[1,8,32], index: 0, kind: input, shape index: {}]
  %s1 = inlined_call_operand.hbm [shape: f32[8,1,8,32], index: 1, kind: input, shape index: {}]
  %s2 = inlined_call_operand.hbm [shape: f32[32,32], index: 2, kind: input, shape index: {}]
  %s3 = inlined_call_operand.hbm [shape: f32[32,32], index: 3, kind: input, shape index: {}]
  %s4 = inlined_call_operand.vmem [shape: f32[1,32], index: 4, kind: input, shape index: {}]
  %s5 = inlined_call_operand.vmem [shape: f32[1,32], index: 5, kind: input, shape index: {}]
  %s6 = inlined_call_operand.hbm [shape: f32[1,8,8], index: 6, kind: output, shape index: {}]
  %s7 = sld [smem:[#allocation0]]
  $region50: #{tpu_custom_call.1} parent=0
    _
  %s9 = ssub.s32 1, %s7
  %s10 = scalar_select 0, %s9, %s7
  $region1: #{tpu_custom_call.1} parent=0
    #allocation2 [shape = 'u8[4096]{0}', space=vmem, size = 0x1000, scoped, tag = 'input window, operand 0, single buffered']
    #allocation3 [shape = 's32[1]{0}', space=sflag, size = 0x4, scoped, tag = 'scoped memory for tpu_custom_call.1']
    #allocation4 [shape = 's32[1]{0}', space=sflag, size = 0x4, scoped, tag = 'scoped memory for tpu_custom_call.1']
    #allocation5 [shape = 'u8[32768]{0}', space=vmem, size = 0x8000, scoped, tag = 'input window, operand 1, single buffered']
    #allocation6 [shape = 's32[1]{0}', space=sflag, size = 0x4, scoped, tag = 'scoped memory for tpu_custom_call.1']
    #allocation7 [shape = 'u8[16384]{0}', space=vmem, size = 0x4000, scoped, tag = 'input window, operand 2, single buffered']
    #allocation8 [shape = 'u8[16384]{0}', space=vmem, size = 0x4000, scoped, tag = 'input window, operand 3, single buffered']
    #allocation9 [shape = 's32[1]{0}', space=sflag, size = 0x4, scoped, tag = 'scoped memory for tpu_custom_call.1']
    #allocation10 [shape = 'u8[4096]{0}', space=vmem, size = 0x1000, scoped, tag = 'output window, operand 0, single buffered']
    %11 = vsyncpa [#allocation3], 0
    %12 = vsyncpa [#allocation6], 0
    %13 = vsyncpa [#allocation9], 0
    %14 = vsyncpa [#allocation4], 0
    // Predicated region
    $region2: #{tpu_custom_call.1} parent=1 // pred_check
      _
    $region3: #{tpu_custom_call.1} parent=1 // pred_check_branch
      %16 = sbr.rel (0) target = $region5
    $region4: #{tpu_custom_call.1} parent=1 // pred_region
      %s18 = ssub.s32 128, 128
      %19 = vsyncadd [#allocation3], %s18
      %s21 = sshll.u32 [#allocation2], 4
      %s22 = int_to_ptr.vmem [resolvable:$true] %s21
      %24 = dma.hbm_to_vmem [thread:$0]  %s0, 128, %s22, [#allocation3]
    $region5: #{tpu_custom_call.1} parent=1 // pred_fallthru
      _
    // Predicated region
    $region6: #{tpu_custom_call.1} parent=1 // pred_check
      _
    $region7: #{tpu_custom_call.1} parent=1 // pred_check_branch
      %26 = sbr.rel (0) target = $region9
    $region8: #{tpu_custom_call.1} parent=1 // pred_region
      %s28 = ssub.s32 1024, 1024
      %29 = vsyncadd [#allocation6], %s28
      %s30 = sshll.u32 [#allocation5], 4
      %s31 = int_to_ptr.vmem [resolvable:$true] %s30
      %36 = dma.hbm_to_vmem [thread:$0]  %s1, 1024, %s31, [#allocation6], 128, 128, 8
    $region9: #{tpu_custom_call.1} parent=1 // pred_fallthru
      _
    // Predicated region
    $region10: #{tpu_custom_call.1} parent=1 // pred_check
      _
    $region11: #{tpu_custom_call.1} parent=1 // pred_check_branch
      %38 = sbr.rel (0) target = $region13
    $region12: #{tpu_custom_call.1} parent=1 // pred_region
      %s40 = ssub.s32 512, 512
      %41 = vsyncadd [#allocation6], %s40
      %s42 = sshll.u32 [#allocation7], 4
      %s43 = int_to_ptr.vmem [resolvable:$true] %s42
      %48 = dma.hbm_to_vmem [thread:$0]  %s2, 512, %s43, [#allocation6], 128, 128, 8
    $region13: #{tpu_custom_call.1} parent=1 // pred_fallthru
      _
    // Predicated region
    $region14: #{tpu_custom_call.1} parent=1 // pred_check
      _
    $region15: #{tpu_custom_call.1} parent=1 // pred_check_branch
      %50 = sbr.rel (0) target = $region17
    $region16: #{tpu_custom_call.1} parent=1 // pred_region
      %s52 = ssub.s32 512, 512
      %53 = vsyncadd [#allocation9], %s52
      %s54 = sshll.u32 [#allocation8], 4
      %s55 = int_to_ptr.vmem [resolvable:$true] %s54
      %60 = dma.hbm_to_vmem [thread:$0]  %s3, 512, %s55, [#allocation9], 128, 128, 8
    $region17: #{tpu_custom_call.1} parent=1 // pred_fallthru
      _
    // Predicated region
    $region18: #{tpu_custom_call.1} parent=1 // pred_check
      _
    $region19: #{tpu_custom_call.1} parent=1 // pred_check_branch
      %62 = sbr.rel (0) target = $region21
    $region20: #{tpu_custom_call.1} parent=1 // pred_region
      _
    $region21: #{tpu_custom_call.1} parent=1 // pred_fallthru
      _
    // Predicated region
    $region22: #{tpu_custom_call.1} parent=1 // pred_check
      _
    $region23: #{tpu_custom_call.1} parent=1 // pred_check_branch
      %64 = sbr.rel (0) target = $region25
    $region24: #{tpu_custom_call.1} parent=1 // pred_region
      _
    $region25: #{tpu_custom_call.1} parent=1 // pred_fallthru
      _
    // Predicated region
    $region26: #{tpu_custom_call.1} parent=1 // pred_check
      _
    $region27: #{tpu_custom_call.1} parent=1 // pred_check_branch
      %66 = sbr.rel (0) target = $region29
    $region28: #{tpu_custom_call.1} parent=1 // pred_region
      %67 = dma.done [#allocation3], 128
    $region29: #{tpu_custom_call.1} parent=1 // pred_fallthru
      _
    // Predicated region
    $region30: #{tpu_custom_call.1} parent=1 // pred_check
      _
    $region31: #{tpu_custom_call.1} parent=1 // pred_check_branch
      %69 = sbr.rel (0) target = $region33
    $region32: #{tpu_custom_call.1} parent=1 // pred_region
      %70 = dma.done [#allocation6], 1024
    $region33: #{tpu_custom_call.1} parent=1 // pred_fallthru
      _
    // Predicated region
    $region34: #{tpu_custom_call.1} parent=1 // pred_check
      _
    $region35: #{tpu_custom_call.1} parent=1 // pred_check_branch
      %72 = sbr.rel (0) target = $region37
    $region36: #{tpu_custom_call.1} parent=1 // pred_region
      %73 = dma.done [#allocation6], 512
    $region37: #{tpu_custom_call.1} parent=1 // pred_fallthru
      _
    // Predicated region
    $region38: #{tpu_custom_call.1} parent=1 // pred_check
      _
    $region39: #{tpu_custom_call.1} parent=1 // pred_check_branch
      %75 = sbr.rel (0) target = $region41
    $region40: #{tpu_custom_call.1} parent=1 // pred_region
      %76 = dma.done [#allocation9], 512
    $region41: #{tpu_custom_call.1} parent=1 // pred_fallthru
      _
    %v77 = vld [vmem:[#allocation2] sm:$0xff]
    %v78 = vld [vmem:[#allocation5] sm:$0xff]
    %v79 = vld [vmem:[#allocation5 + $0x8] sm:$0xff]
    %v80 = vld [vmem:[#allocation5 + $0x10] sm:$0xff]
    %v81 = vld [vmem:[#allocation5 + $0x18] sm:$0xff]
    %v82 = vld [vmem:[#allocation5 + $0x20] sm:$0xff]
    %v83 = vld [vmem:[#allocation5 + $0x28] sm:$0xff]
    %v84 = vld [vmem:[#allocation5 + $0x30] sm:$0xff]
    %v85 = vld [vmem:[#allocation5 + $0x38] sm:$0xff]
    %v86 = vld [vmem:[#allocation7] sm:$0xff]
    %v87 = vld [vmem:[#allocation7 + $0x8] sm:$0xff]
    %v88 = vld [vmem:[#allocation7 + $0x10] sm:$0xff]
    %v89 = vld [vmem:[#allocation7 + $0x18] sm:$0xff]
    %v90 = vld [vmem:[#allocation8] sm:$0xff]
    %v91 = vld [vmem:[#allocation8 + $0x8] sm:$0xff]
    %v92 = vld [vmem:[#allocation8 + $0x10] sm:$0xff]
    %v93 = vld [vmem:[#allocation8 + $0x18] sm:$0xff]
    %vm94 = vcmask 261120
    %v96 = vsel %vm94, %v78, 0
    %v99 = vsel %vm94, %v79, 0
    %v102 = vsel %vm94, %v80, 0
    %v105 = vsel %vm94, %v81, 0
    %v108 = vsel %vm94, %v82, 0
    %v111 = vsel %vm94, %v83, 0
    %v114 = vsel %vm94, %v84, 0
    %v117 = vsel %vm94, %v85, 0
    %119 = vmatprep.subr.mxu0 0.0
    %120 = vmatpush1.msra.mxu0 %v90
    %121 = vmatprep.subr.mxu0 0.0
    %122 = vmatpush1.msra.mxu0 %v91
    %123 = vmatprep.subr.mxu0 0.0
    %124 = vmatpush1.msra.mxu0 %v92
    %125 = vmatprep.subr.mxu0 0.0
    %126 = vmatpush1.msra.mxu0 %v93
    %127 = vmatprep.subr.mxu0 0.0
    %128 = vmatpush1.msra.mxu0 0.0
    %129 = vmatprep.subr.mxu0 0.0
    %130 = vmatpush1.msra.mxu0 0.0
    %131 = vmatprep.subr.mxu0 0.0
    %132 = vmatpush1.msra.mxu0 0.0
    %133 = vmatprep.subr.mxu0 0.0
    %134 = vmatpush1.msra.mxu0 0.0
    %135 = vmatprep.subr.mxu0 0.0
    %136 = vmatpush1.msra.mxu0 0.0
    %137 = vmatprep.subr.mxu0 0.0
    %138 = vmatpush1.msra.mxu0 0.0
    %139 = vmatprep.subr.mxu0 0.0
    %140 = vmatpush1.msra.mxu0 0.0
    %141 = vmatprep.subr.mxu0 0.0
    %142 = vmatpush1.msra.mxu0 0.0
    %143 = vmatprep.subr.mxu0 0.0
    %144 = vmatpush1.msra.mxu0 0.0
    %145 = vmatprep.subr.mxu0 0.0
    %146 = vmatpush1.msra.mxu0 0.0
    %147 = vmatprep.subr.mxu0 0.0
    %148 = vmatpush1.msra.mxu0 0.0
    %149 = vmatprep.subr.mxu0 0.0
    %150 = vmatpush1.msra.mxu0 0.0
    %151 = vmatprep.subr.mxu0 0.0
    %152 = vmatpush1.msra.mxu0 0.0
    %153 = vmatprep.subr.mxu0 0.0
    %154 = vmatpush1.msra.mxu0 0.0
    %155 = vmatprep.subr.mxu0 0.0
    %156 = vmatpush1.msra.mxu0 0.0
    %157 = vmatprep.subr.mxu0 0.0
    %158 = vmatpush1.msra.mxu0 0.0
    %159 = vmatprep.subr.mxu0 0.0
    %160 = vmatpush1.msra.mxu0 0.0
    %161 = vmatprep.subr.mxu0 0.0
    %162 = vmatpush1.msra.mxu0 0.0
    %163 = vmatprep.subr.mxu0 0.0
    %164 = vmatpush1.msra.mxu0 0.0
    %165 = vmatprep.subr.mxu0 0.0
    %166 = vmatpush1.msra.mxu0 0.0
    %167 = vmatprep.subr.mxu0 0.0
    %168 = vmatpush1.msra.mxu0 0.0
    %169 = vmatprep.subr.mxu0 0.0
    %170 = vmatpush1.msra.mxu0 0.0
    %171 = vmatprep.subr.mxu0 0.0
    %172 = vmatpush1.msra.mxu0 0.0
    %173 = vmatprep.subr.mxu0 0.0
    %174 = vmatpush1.msra.mxu0 0.0
    %175 = vmatprep.subr.mxu0 0.0
    %176 = vmatpush1.msra.mxu0 0.0
    %177 = vmatprep.subr.mxu0 0.0
    %178 = vmatpush1.msra.mxu0 0.0
    %179 = vmatprep.subr.mxu0 0.0
    %180 = vmatpush1.msra.mxu0 0.0
    %181 = vmatprep.subr.mxu0 0.0
    %182 = vmatpush1.msra.mxu0 0.0
    %183 = vmatprep.mubr.f32.mxu0 0.0
    %184 = vmatmul.mubr.f32.gmra.mrb[0].mxu0 %v96
    %v185 = vpop.f32.mrb[0].mxu0
    %v186 = vadd.f32 0.0, %v185
    %v187 = vpop.f32.mrb[0].mxu0
    %188 = vmatprep.mubr.f32.mxu0 0.0
    %189 = vmatmul.mubr.f32.gmra.mrb[0].mxu0 %v99
    %v190 = vpop.f32.mrb[0].mxu0
    %v191 = vadd.f32 0.0, %v190
    %v192 = vpop.f32.mrb[0].mxu0
    %193 = vmatprep.mubr.f32.mxu0 0.0
    %194 = vmatmul.mubr.f32.gmra.mrb[0].mxu0 %v102
    %v195 = vpop.f32.mrb[0].mxu0
    %v196 = vadd.f32 0.0, %v195
    %v197 = vpop.f32.mrb[0].mxu0
    %198 = vmatprep.mubr.f32.mxu0 0.0
    %199 = vmatmul.mubr.f32.gmra.mrb[0].mxu0 %v105
    %v200 = vpop.f32.mrb[0].mxu0
    %v201 = vadd.f32 0.0, %v200
    %v202 = vpop.f32.mrb[0].mxu0
    %203 = vmatprep.mubr.f32.mxu0 0.0
    %204 = vmatmul.mubr.f32.gmra.mrb[0].mxu0 %v108
    %v205 = vpop.f32.mrb[0].mxu0
    %v206 = vadd.f32 0.0, %v205
    %v207 = vpop.f32.mrb[0].mxu0
    %208 = vmatprep.mubr.f32.mxu0 0.0
    %209 = vmatmul.mubr.f32.gmra.mrb[0].mxu0 %v111
    %v210 = vpop.f32.mrb[0].mxu0
    %v211 = vadd.f32 0.0, %v210
    %v212 = vpop.f32.mrb[0].mxu0
    %213 = vmatprep.mubr.f32.mxu0 0.0
    %214 = vmatmul.mubr.f32.gmra.mrb[0].mxu0 %v114
    %v215 = vpop.f32.mrb[0].mxu0
    %v216 = vadd.f32 0.0, %v215
    %v217 = vpop.f32.mrb[0].mxu0
    %218 = vmatprep.mubr.f32.mxu0 0.0
    %219 = vmatmul.mubr.f32.gmra.mrb[0].mxu0 %v117
    %v220 = vpop.f32.mrb[0].mxu0
    %v221 = vadd.f32 0.0, %v220
    %v222 = vpop.f32.mrb[0].mxu0
    %223 = vdwg.mxu0
    %v224 = vld [vmem:[%s4] sm:$0x1]
    %v226 = vlaneseq
    %v227 = vshrl.u32 %v226, 7
    %v228 = vsub.s32 0, %v227
    %v229 = vrot.slane %v224, %v228
    %v232 = vsel %vm94, %v77, 0
    %234 = vmatprep.subr.mxu0 0.0
    %235 = vmatpush1.msra.mxu0 %v86
    %236 = vmatprep.subr.mxu0 0.0
    %237 = vmatpush1.msra.mxu0 %v87
    %238 = vmatprep.subr.mxu0 0.0
    %239 = vmatpush1.msra.mxu0 %v88
    %240 = vmatprep.subr.mxu0 0.0
    %241 = vmatpush1.msra.mxu0 %v89
    %242 = vmatprep.subr.mxu0 0.0
    %243 = vmatpush1.msra.mxu0 0.0
    %244 = vmatprep.subr.mxu0 0.0
    %245 = vmatpush1.msra.mxu0 0.0
    %246 = vmatprep.subr.mxu0 0.0
    %247 = vmatpush1.msra.mxu0 0.0
    %248 = vmatprep.subr.mxu0 0.0
    %249 = vmatpush1.msra.mxu0 0.0
    %250 = vmatprep.subr.mxu0 0.0
    %251 = vmatpush1.msra.mxu0 0.0
    %252 = vmatprep.subr.mxu0 0.0
    %253 = vmatpush1.msra.mxu0 0.0
    %254 = vmatprep.subr.mxu0 0.0
    %255 = vmatpush1.msra.mxu0 0.0
    %256 = vmatprep.subr.mxu0 0.0
    %257 = vmatpush1.msra.mxu0 0.0
    %258 = vmatprep.subr.mxu0 0.0
    %259 = vmatpush1.msra.mxu0 0.0
    %260 = vmatprep.subr.mxu0 0.0
    %261 = vmatpush1.msra.mxu0 0.0
    %262 = vmatprep.subr.mxu0 0.0
    %263 = vmatpush1.msra.mxu0 0.0
    %264 = vmatprep.subr.mxu0 0.0
    %265 = vmatpush1.msra.mxu0 0.0
    %266 = vmatprep.subr.mxu0 0.0
    %267 = vmatpush1.msra.mxu0 0.0
    %268 = vmatprep.subr.mxu0 0.0
    %269 = vmatpush1.msra.mxu0 0.0
    %270 = vmatprep.subr.mxu0 0.0
    %271 = vmatpush1.msra.mxu0 0.0
    %272 = vmatprep.subr.mxu0 0.0
    %273 = vmatpush1.msra.mxu0 0.0
    %274 = vmatprep.subr.mxu0 0.0
    %275 = vmatpush1.msra.mxu0 0.0
    %276 = vmatprep.subr.mxu0 0.0
    %277 = vmatpush1.msra.mxu0 0.0
    %278 = vmatprep.subr.mxu0 0.0
    %279 = vmatpush1.msra.mxu0 0.0
    %280 = vmatprep.subr.mxu0 0.0
    %281 = vmatpush1.msra.mxu0 0.0
    %282 = vmatprep.subr.mxu0 0.0
    %283 = vmatpush1.msra.mxu0 0.0
    %284 = vmatprep.subr.mxu0 0.0
    %285 = vmatpush1.msra.mxu0 0.0
    %286 = vmatprep.subr.mxu0 0.0
    %287 = vmatpush1.msra.mxu0 0.0
    %288 = vmatprep.subr.mxu0 0.0
    %289 = vmatpush1.msra.mxu0 0.0
    %290 = vmatprep.subr.mxu0 0.0
    %291 = vmatpush1.msra.mxu0 0.0
    %292 = vmatprep.subr.mxu0 0.0
    %293 = vmatpush1.msra.mxu0 0.0
    %294 = vmatprep.subr.mxu0 0.0
    %295 = vmatpush1.msra.mxu0 0.0
    %296 = vmatprep.subr.mxu0 0.0
    %297 = vmatpush1.msra.mxu0 0.0
    %298 = vmatprep.mubr.f32.mxu0 0.0
    %299 = vmatmul.mubr.f32.gmra.mrb[0].mxu0 %v232
    %v300 = vpop.f32.mrb[0].mxu0
    %v301 = vadd.f32 %v229, %v300
    %v302 = vpop.f32.mrb[0].mxu0
    %303 = vdwg.mxu0
    %v304 = vadd.f32 %v186, %v301
    %v305 = vadd.f32 %v191, %v301
    %v306 = vadd.f32 %v196, %v301
    %v307 = vadd.f32 %v201, %v301
    %v308 = vadd.f32 %v206, %v301
    %v309 = vadd.f32 %v211, %v301
    %v310 = vadd.f32 %v216, %v301
    %v311 = vadd.f32 %v221, %v301
    %v312 = vtanh.pop %v304
    %v313 = vtanh.pop %v305
    %v314 = vtanh.pop %v306
    %v315 = vtanh.pop %v307
    %v316 = vtanh.pop %v308
    %v317 = vtanh.pop %v309
    %v318 = vtanh.pop %v310
    %v319 = vtanh.pop %v311
    %v320 = vld [vmem:[%s5] sm:$0x1]
    %v322 = vlaneseq
    %v323 = vshrl.u32 %v322, 7
    %v324 = vsub.s32 0, %v323
    %v325 = vrot.slane %v320, %v324
    %v327 = vmul.f32 %v312, %v325
    %v328 = vmul.f32 %v313, %v325
    %v329 = vmul.f32 %v314, %v325
    %v330 = vmul.f32 %v315, %v325
    %v331 = vmul.f32 %v316, %v325
    %v332 = vmul.f32 %v317, %v325
    %v333 = vmul.f32 %v318, %v325
    %v334 = vmul.f32 %v319, %v325
    %v335 = vsel %vm94, %v327, 0.0
    %336 = vadd.xlane.f32.xlu0 %v335
    %v337 = vpop.xlane.xlu0 %336
    %v338 = vsel %vm94, %v328, 0.0
    %339 = vadd.xlane.f32.xlu0 %v338
    %v340 = vpop.xlane.xlu0 %339
    %v341 = vsel %vm94, %v329, 0.0
    %342 = vadd.xlane.f32.xlu0 %v341
    %v343 = vpop.xlane.xlu0 %342
    %v344 = vsel %vm94, %v330, 0.0
    %345 = vadd.xlane.f32.xlu0 %v344
    %v346 = vpop.xlane.xlu0 %345
    %v347 = vsel %vm94, %v331, 0.0
    %348 = vadd.xlane.f32.xlu0 %v347
    %v349 = vpop.xlane.xlu0 %348
    %v350 = vsel %vm94, %v332, 0.0
    %351 = vadd.xlane.f32.xlu0 %v350
    %v352 = vpop.xlane.xlu0 %351
    %v353 = vsel %vm94, %v333, 0.0
    %354 = vadd.xlane.f32.xlu0 %v353
    %v355 = vpop.xlane.xlu0 %354
    %v356 = vsel %vm94, %v334, 0.0
    %357 = vadd.xlane.f32.xlu0 %v356
    %v358 = vpop.xlane.xlu0 %357
    %v367 = vlaneseq
    %v368 = vand.u32 %v367, 127
    %v369 = vlaneseq
    %v370 = vshrl.u32 %v369, 7
    %v371 = vsub.s32 %v368, %v370
    %v372 = vrot.slane %v337, %v371
    %v373 = vlaneseq
    %v374 = vshrl.u32 %v373, 7
    %v375 = vsub.s32 %v368, %v374
    %v376 = vrot.slane %v340, %v375
    %v377 = vlaneseq
    %v378 = vshrl.u32 %v377, 7
    %v379 = vsub.s32 %v368, %v378
    %v380 = vrot.slane %v343, %v379
    %v381 = vlaneseq
    %v382 = vshrl.u32 %v381, 7
    %v383 = vsub.s32 %v368, %v382
    %v384 = vrot.slane %v346, %v383
    %v385 = vlaneseq
    %v386 = vshrl.u32 %v385, 7
    %v387 = vsub.s32 %v368, %v386
    %v388 = vrot.slane %v349, %v387
    %v389 = vlaneseq
    %v390 = vshrl.u32 %v389, 7
    %v391 = vsub.s32 %v368, %v390
    %v392 = vrot.slane %v352, %v391
    %v393 = vlaneseq
    %v394 = vshrl.u32 %v393, 7
    %v395 = vsub.s32 %v368, %v394
    %v396 = vrot.slane %v355, %v395
    %v397 = vlaneseq
    %v398 = vshrl.u32 %v397, 7
    %v399 = vsub.s32 %v368, %v398
    %v400 = vrot.slane %v358, %v399
    %vm401 = vcmask 1041409
    %v402 = vsel %vm401, %v376, %v372
    %vm403 = vcmask 1042434
    %v404 = vsel %vm403, %v380, %v402
    %vm405 = vcmask 1043459
    %v406 = vsel %vm405, %v384, %v404
    %vm407 = vcmask 1044484
    %v408 = vsel %vm407, %v388, %v406
    %vm409 = vcmask 1045509
    %v410 = vsel %vm409, %v392, %v408
    %vm411 = vcmask 1046534
    %v412 = vsel %vm411, %v396, %v410
    %vm413 = vcmask 1047559
    %v414 = vsel %vm413, %v400, %v412
    %416 = vxpose.xlu0.b32.start [1/16] %v414, 128
    %417 = vxpose.xlu0.b32.cont [2/16] 0.0, 128
    %418 = vxpose.xlu0.b32.cont [3/16] 0.0, 128
    %419 = vxpose.xlu0.b32.cont [4/16] 0.0, 128
    %420 = vxpose.xlu0.b32.cont [5/16] 0.0, 128
    %421 = vxpose.xlu0.b32.cont [6/16] 0.0, 128
    %422 = vxpose.xlu0.b32.cont [7/16] 0.0, 128
    %423 = vxpose.xlu0.b32.cont [8/16] 0.0, 128
    %424 = vxpose.xlu0.b32.cont [9/16] 0.0, 128
    %425 = vxpose.xlu0.b32.cont [10/16] 0.0, 128
    %426 = vxpose.xlu0.b32.cont [11/16] 0.0, 128
    %427 = vxpose.xlu0.b32.cont [12/16] 0.0, 128
    %428 = vxpose.xlu0.b32.cont [13/16] 0.0, 128
    %429 = vxpose.xlu0.b32.cont [14/16] 0.0, 128
    %430 = vxpose.xlu0.b32.cont [15/16] 0.0, 128
    %431 = vxpose.xlu0.b32.end [16/16] 0.0, 128
    %v432 = vpop.trf.xlu0
    %v433 = vpop.trf.xlu0
    %v434 = vpop.trf.xlu0
    %v435 = vpop.trf.xlu0
    %v436 = vpop.trf.xlu0
    %v437 = vpop.trf.xlu0
    %v438 = vpop.trf.xlu0
    %v439 = vpop.trf.xlu0
    %v440 = vpop.trf.xlu0
    %v441 = vpop.trf.xlu0
    %v442 = vpop.trf.xlu0
    %v443 = vpop.trf.xlu0
    %v444 = vpop.trf.xlu0
    %v445 = vpop.trf.xlu0
    %v446 = vpop.trf.xlu0
    %v447 = vpop.trf.xlu0
    %vm448 = vcmask 64512
    %v449 = vsel %vm448, %v432, -inf
    %450 = vmax.xlane.f32.xlu0 %v449
    %v451 = vpop.xlane.xlu0 %450
    %v452 = vsub.f32 %v432, %v451
    %v453 = vmul.f32 %v452, 1.442695
    %v454 = vpow.pop %v453
    %v455 = vsel %vm448, %v454, 0.0
    %456 = vadd.xlane.f32.xlu0 %v455
    %v457 = vpop.xlane.xlu0 %456
    %v458 = vrcp.pop %v457
    %v459 = vmul.f32 %v454, %v458
    %460 = vst.msk [vmem:[#allocation10] sm:$0xff] %vm448, %v459
    // Predicated region
    $region42: #{tpu_custom_call.1} parent=1 // pred_check
      _
    $region43: #{tpu_custom_call.1} parent=1 // pred_check_branch
      %462 = sbr.rel (0) target = $region45
    $region44: #{tpu_custom_call.1} parent=1 // pred_region
      %s464 = ssub.s32 128, 128
      %465 = vsyncadd [#allocation4], %s464
      %s467 = sshll.u32 [#allocation10], 4
      %s468 = int_to_ptr.vmem [resolvable:$true] %s467
      %470 = dma.vmem_to_hbm [thread:$0]  %s468, 128, %s6, [#allocation4]
    $region45: #{tpu_custom_call.1} parent=1 // pred_fallthru
      _
    // Predicated region
    $region46: #{tpu_custom_call.1} parent=1 // pred_check
      _
    $region47: #{tpu_custom_call.1} parent=1 // pred_check_branch
      %472 = sbr.rel (0) target = $region49
    $region48: #{tpu_custom_call.1} parent=1 // pred_region
      %473 = dma.done [#allocation4], 128
    $region49: #{tpu_custom_call.1} parent=1 // pred_fallthru
      _
    %474 = vsyncpa [#allocation3], 1
    %475 = vsyncpa [#allocation6], 1
    %476 = vsyncpa [#allocation9], 1
    %477 = vsyncpa [#allocation4], 1

</llo_original>
